<compile_context>
chip_gen: v7x
topology: tpu7x:2x2x1
jax: 0.10.0
libtpu: 0.0.40
codegen_flags: <defaults>
</compile_context>

<pallas_src>
import jax
import jax.numpy as jnp
from jax.experimental import pallas as pl
from jax.experimental.pallas import tpu as pltpu


def _round_up(n, m):
    return ((n + m - 1) // m) * m


def _choose_tile_b(B, tile_b):
    """Pick the batch tile: multiple of 8; for larger B a multiple of 256 and
    small enough that the grid has >= 2 steps (both v7x TensorCores used)."""
    b8 = _round_up(B, 8)
    if b8 <= 256:
        return b8                                   # single small tile
    tile_b = max(256, (tile_b // 256) * 256)        # MXU-friendly M multiple
    half = _round_up((b8 + 1) // 2, 256)            # >= 2 grid steps
    return min(tile_b, half)


def decoder4_kernel(x_ref, w1_ref, b1_ref, w2_ref, b2_ref, w3_ref, b3_ref, o_ref):
    """Fused 3-layer MLP: bf16 matmuls on the MXU, f32 accumulate + epilogue.

    BN is pre-folded into (w1,b1)/(w2,b2); Dropout is identity at inference.
    The output block is the real (tb, out_dim) slab -- no padded lanes stored.
    """
    x = x_ref[...].astype(jnp.bfloat16)

    # fc1 (+ folded BN1) + relu
    h1 = jnp.dot(x, w1_ref[...], preferred_element_type=jnp.float32) + b1_ref[...]
    h1 = jnp.maximum(h1, 0.0)

    # fc2 (+ folded BN2) + relu
    h2 = jnp.dot(h1.astype(jnp.bfloat16), w2_ref[...],
                 preferred_element_type=jnp.float32) + b2_ref[...]
    h2 = jnp.maximum(h2, 0.0)

    # fc3 + sigmoid, only the real out_dim columns are computed/stored
    y = jnp.dot(h2.astype(jnp.bfloat16), w3_ref[...],
                preferred_element_type=jnp.float32) + b3_ref[...]
    o_ref[...] = jax.nn.sigmoid(y).astype(o_ref.dtype)


def decoder4_forward(x, params, *, tile_b=2048):
    """x: (B, input_dim) float32 or bfloat16. Returns (B, output_dim) float32."""
    B, in_dim = x.shape
    h1 = params["w1"].shape[1]
    h2 = params["w2"].shape[1]
    out_dim = params["w3"].shape[1]

    tb = _choose_tile_b(B, tile_b)
    grid = (pl.cdiv(B, tb),)   # ragged last block is clipped by Pallas

    def const_spec(shape):
        # grid-constant parameter blocks (weights / biases), never re-indexed
        return pl.BlockSpec(shape, lambda i: (0, 0))

    in_specs = [
        pl.BlockSpec((tb, in_dim), lambda i: (i, 0)),    # x tile (streams)
        const_spec((in_dim, h1)), const_spec((1, h1)),   # w1', b1'  (BN folded)
        const_spec((h1, h2)),     const_spec((1, h2)),   # w2', b2'  (BN folded)
        const_spec((h2, out_dim)), const_spec((1, out_dim)),  # w3, b3
    ]
    # out_dim < 128 is legal because it equals the full array's last dim;
    # the narrow store is far cheaper than the padded-block + slice it replaces.
    out_spec = pl.BlockSpec((tb, out_dim), lambda i: (i, 0))

    return pl.pallas_call(
        decoder4_kernel,
        out_shape=jax.ShapeDtypeStruct((B, out_dim), jnp.float32),
        grid_spec=pltpu.PrefetchScalarGridSpec(
            num_scalar_prefetch=0,
            grid=grid,
            in_specs=in_specs,
            out_specs=out_spec,
        ),
        compiler_params=pltpu.CompilerParams(
            dimension_semantics=("parallel",)),
        # NOTE: set vmem_limit_bytes here only if tile_b is raised far beyond
        # 2048 (footprint at 2048 is ~5 MiB, well under all scoped defaults).
    )(x,
      params["w1"], params["b1"],
      params["w2"], params["b2"],
      params["w3"], params["b3"])


# ----------------------------------------------------------------------------
# Parameter construction / host-side BN folding
# ----------------------------------------------------------------------------

def make_raw_params(key, input_dim, output_dim):
    """Deterministic synthetic params matching Decoder4.__init__ shapes."""
    ks = jax.random.split(key, 16)

    def lin(kw, kb, fi, fo):
        bound = 1.0 / jnp.sqrt(fi)
        w = jax.random.uniform(kw, (fi, fo), jnp.float32, -bound, bound)
        b = jax.random.uniform(kb, (fo,), jnp.float32, -bound, bound)
        return w, b

    def bn(kg, kb, km, kv, c):
        gamma = 1.0 + 0.1 * jax.random.normal(kg, (c,), jnp.float32)
        beta = 0.1 * jax.random.normal(kb, (c,), jnp.float32)
        mean = 0.1 * jax.random.normal(km, (c,), jnp.float32)
        var = jnp.abs(1.0 + 0.1 * jax.random.normal(kv, (c,), jnp.float32))
        return gamma, beta, mean, var

    w1, b1 = lin(ks[0], ks[1], input_dim, 256)
    w2, b2 = lin(ks[2], ks[3], 256, 128)
    w3, b3 = lin(ks[4], ks[5], 128, output_dim)
    g1, be1, m1, v1 = bn(ks[6], ks[7], ks[8], ks[9], 256)
    g2, be2, m2, v2 = bn(ks[10], ks[11], ks[12], ks[13], 128)

    return dict(w1=w1, b1=b1, w2=w2, b2=b2, w3=w3, b3=b3,
                g1=g1, be1=be1, m1=m1, v1=v1,
                g2=g2, be2=be2, m2=m2, v2=v2)


def fold_params(raw, eps=1e-5):
    """Fold eval-mode BatchNorm into the linear layers; bf16 weights, f32 biases.

    BN(x) = gamma * (x - mean) / sqrt(var + eps) + beta applied after fc
            => w' = w * s (column-wise), b' = b * s + t
            with s = gamma / sqrt(var + eps), t = beta - mean * s.
    No lane padding of w3/b3: the kernel stores the real out_dim columns.
    """
    s1 = raw["g1"] / jnp.sqrt(raw["v1"] + eps)
    t1 = raw["be1"] - raw["m1"] * s1
    s2 = raw["g2"] / jnp.sqrt(raw["v2"] + eps)
    t2 = raw["be2"] - raw["m2"] * s2

    w1f = (raw["w1"] * s1[None, :]).astype(jnp.bfloat16)
    b1f = (raw["b1"] * s1 + t1)[None, :].astype(jnp.float32)
    w2f = (raw["w2"] * s2[None, :]).astype(jnp.bfloat16)
    b2f = (raw["b2"] * s2 + t2)[None, :].astype(jnp.float32)
    w3f = raw["w3"].astype(jnp.bfloat16)
    b3f = raw["b3"][None, :].astype(jnp.float32)

    return dict(w1=w1f, b1=b1f, w2=w2f, b2=b2f, w3=w3f, b3=b3f)


if __name__ == "__main__":
    key = jax.random.PRNGKey(0)
    k_x1, k_x2, k_p = jax.random.split(key, 3)

    input_dim, output_dim = 32, 16
    raw = make_raw_params(k_p, input_dim, output_dim)
    params = fold_params(raw)

    eps = 1e-5
    s1 = raw["g1"] / jnp.sqrt(raw["v1"] + eps); t1 = raw["be1"] - raw["m1"] * s1
    s2 = raw["g2"] / jnp.sqrt(raw["v2"] + eps); t2 = raw["be2"] - raw["m2"] * s2
    f32 = lambda a: a.astype(jnp.float32)

    def ref_bf16(x):
        # identical bf16 operand rounding as the kernel (tight tolerance)
        r1 = jnp.maximum(f32(x.astype(jnp.bfloat16)) @ f32(params["w1"]) + params["b1"], 0.0)
        r2 = jnp.maximum(f32(r1.astype(jnp.bfloat16)) @ f32(params["w2"]) + params["b2"], 0.0)
        return jax.nn.sigmoid(f32(r2.astype(jnp.bfloat16)) @ f32(params["w3"]) + params["b3"])

    def ref_f32(x):
        # full-f32 eval-mode PyTorch semantics (loose tol for bf16 operands)
        h1 = jnp.maximum((x @ raw["w1"] + raw["b1"]) * s1 + t1, 0.0)
        h2 = jnp.maximum((h1 @ raw["w2"] + raw["b2"]) * s2 + t2, 0.0)
        return jax.nn.sigmoid(h2 @ raw["w3"] + raw["b3"])

    # Case 1: tiny batch (single small tile, grid of 1).
    x1 = jax.random.normal(k_x1, (8, input_dim), jnp.float32)
    y1 = jax.block_until_ready(decoder4_forward(x1, params))
    assert y1.shape == (8, output_dim)
    assert jnp.allclose(y1, ref_bf16(x1), atol=2e-3), "case1: mismatch vs bf16-matched ref"
    assert jnp.allclose(y1, ref_f32(x1), atol=5e-2), "case1: mismatch vs f32 eval-mode ref"

    # Case 2: ragged batch (2 grid steps, clipped edge block, no host padding).
    x2 = jax.random.normal(k_x2, (300, input_dim), jnp.float32)
    y2 = jax.block_until_ready(decoder4_forward(x2, params))
    assert y2.shape == (300, output_dim)
    assert bool(jnp.all(jnp.isfinite(y2)))
    assert jnp.allclose(y2, ref_bf16(x2), atol=2e-3), "case2: mismatch vs bf16-matched ref"
    assert jnp.allclose(y2, ref_f32(x2), atol=5e-2), "case2: mismatch vs f32 eval-mode ref"

    print("KERNEL_OK")
</pallas_src>

<mosaic_0001>
module attributes {stable_mosaic.version = 11 : i64} {
  func.func @decoder4_kernel(%arg0: i32, %arg1: memref<8x32xf32, #tpu.memory_space<vmem>>, %arg2: memref<32x256xbf16, #tpu.memory_space<vmem>>, %arg3: memref<1x256xf32, #tpu.memory_space<vmem>>, %arg4: memref<256x128xbf16, #tpu.memory_space<vmem>>, %arg5: memref<1x128xf32, #tpu.memory_space<vmem>>, %arg6: memref<128x16xbf16, #tpu.memory_space<vmem>>, %arg7: memref<1x16xf32, #tpu.memory_space<vmem>>, %arg8: memref<8x16xf32, #tpu.memory_space<vmem>>) attributes {dimension_semantics = [#tpu.dimension_semantics<parallel>], iteration_bounds = array<i64: 1>, scalar_prefetch = 0 : i64, scratch_operands = 0 : i64, tpu.core_type = #tpu.core_type<tc>, window_params = [{transform_indices = @transform_0, window_bounds = array<i64: 8, 32>}, {pipeline_mode = #tpu.pipeline_mode<synchronous>, transform_indices = @transform_1, window_bounds = array<i64: 32, 256>}, {pipeline_mode = #tpu.pipeline_mode<synchronous>, transform_indices = @transform_2, window_bounds = array<i64: 1, 256>}, {pipeline_mode = #tpu.pipeline_mode<synchronous>, transform_indices = @transform_3, window_bounds = array<i64: 256, 128>}, {pipeline_mode = #tpu.pipeline_mode<synchronous>, transform_indices = @transform_4, window_bounds = array<i64: 1, 128>}, {pipeline_mode = #tpu.pipeline_mode<synchronous>, transform_indices = @transform_5, window_bounds = array<i64: 128, 16>}, {pipeline_mode = #tpu.pipeline_mode<synchronous>, transform_indices = @transform_6, window_bounds = array<i64: 1, 16>}, {transform_indices = @transform_7, window_bounds = array<i64: 8, 16>}]} {
    %c0 = arith.constant 0 : index
    %c0_0 = arith.constant 0 : index
    %0 = vector.load %arg1[%c0, %c0_0] : memref<8x32xf32, #tpu.memory_space<vmem>>, vector<8x32xf32>
    %1 = arith.truncf %0 : vector<8x32xf32> to vector<8x32xbf16>
    %c0_1 = arith.constant 0 : index
    %c0_2 = arith.constant 0 : index
    %2 = vector.load %arg2[%c0_1, %c0_2] : memref<32x256xbf16, #tpu.memory_space<vmem>>, vector<32x256xbf16>
    %cst = arith.constant dense<0.000000e+00> : vector<8x256xf32>
    %3 = tpu.matmul %1, %2, %cst {dimension_numbers = #tpu.dot_dimension_numbers<[1], [0], [0], [1], [0, 0, 1, 1], [], []>} : vector<8x32xbf16>, vector<32x256xbf16>, vector<8x256xf32> -> vector<8x256xf32>
    %c0_3 = arith.constant 0 : index
    %c0_4 = arith.constant 0 : index
    %4 = vector.load %arg3[%c0_3, %c0_4] : memref<1x256xf32, #tpu.memory_space<vmem>>, vector<1x256xf32>
    %5 = vector.broadcast %4 : vector<1x256xf32> to vector<8x256xf32>
    %6 = arith.addf %3, %5 : vector<8x256xf32>
    %cst_5 = arith.constant 0.000000e+00 : f32
    %7 = vector.broadcast %cst_5 : f32 to vector<8x256xf32>
    %8 = arith.maximumf %6, %7 : vector<8x256xf32>
    %9 = arith.truncf %8 : vector<8x256xf32> to vector<8x256xbf16>
    %c0_6 = arith.constant 0 : index
    %c0_7 = arith.constant 0 : index
    %10 = vector.load %arg4[%c0_6, %c0_7] : memref<256x128xbf16, #tpu.memory_space<vmem>>, vector<256x128xbf16>
    %cst_8 = arith.constant dense<0.000000e+00> : vector<8x128xf32>
    %11 = tpu.matmul %9, %10, %cst_8 {dimension_numbers = #tpu.dot_dimension_numbers<[1], [0], [0], [1], [0, 0, 1, 1], [], []>} : vector<8x256xbf16>, vector<256x128xbf16>, vector<8x128xf32> -> vector<8x128xf32>
    %c0_9 = arith.constant 0 : index
    %c0_10 = arith.constant 0 : index
    %12 = vector.load %arg5[%c0_9, %c0_10] : memref<1x128xf32, #tpu.memory_space<vmem>>, vector<1x128xf32>
    %13 = vector.broadcast %12 : vector<1x128xf32> to vector<8x128xf32>
    %14 = arith.addf %11, %13 : vector<8x128xf32>
    %cst_11 = arith.constant 0.000000e+00 : f32
    %15 = vector.broadcast %cst_11 : f32 to vector<8x128xf32>
    %16 = arith.maximumf %14, %15 : vector<8x128xf32>
    %17 = arith.truncf %16 : vector<8x128xf32> to vector<8x128xbf16>
    %c0_12 = arith.constant 0 : index
    %c0_13 = arith.constant 0 : index
    %18 = vector.load %arg6[%c0_12, %c0_13] : memref<128x16xbf16, #tpu.memory_space<vmem>>, vector<128x16xbf16>
    %cst_14 = arith.constant dense<0.000000e+00> : vector<8x16xf32>
    %19 = tpu.matmul %17, %18, %cst_14 {dimension_numbers = #tpu.dot_dimension_numbers<[1], [0], [0], [1], [0, 0, 1, 1], [], []>} : vector<8x128xbf16>, vector<128x16xbf16>, vector<8x16xf32> -> vector<8x16xf32>
    %c0_15 = arith.constant 0 : index
    %c0_16 = arith.constant 0 : index
    %20 = vector.load %arg7[%c0_15, %c0_16] : memref<1x16xf32, #tpu.memory_space<vmem>>, vector<1x16xf32>
    %21 = vector.broadcast %20 : vector<1x16xf32> to vector<8x16xf32>
    %22 = arith.addf %19, %21 : vector<8x16xf32>
    %23 = arith.negf %22 : vector<8x16xf32>
    %24 = math.exp %23 : vector<8x16xf32>
    %cst_17 = arith.constant 1.000000e+00 : f32
    %25 = vector.broadcast %cst_17 : f32 to vector<8x16xf32>
    %26 = arith.addf %25, %24 : vector<8x16xf32>
    %27 = arith.divf %25, %26 : vector<8x16xf32>
    %c0_18 = arith.constant 0 : index
    %c0_19 = arith.constant 0 : index
    %28 = vector.load %arg8[%c0_18, %c0_19] : memref<8x16xf32, #tpu.memory_space<vmem>>, vector<8x16xf32>
    tpu.vector_store %arg8[%c0_18, %c0_19], %27 {strides = array<i32>} : memref<8x16xf32, #tpu.memory_space<vmem>>, vector<8x16xf32>,
    return
  }
  func.func @transform_0(%arg0: i32) -> (i32, i32) {
    %c0_i32 = arith.constant 0 : i32
    %c0_i32_0 = arith.constant 0 : i32
    return %arg0, %c0_i32 : i32, i32
  }
  func.func @transform_1(%arg0: i32) -> (i32, i32) {
    %c0_i32 = arith.constant 0 : i32
    %c0_i32_0 = arith.constant 0 : i32
    %c0_i32_1 = arith.constant 0 : i32
    return %c0_i32, %c0_i32_0 : i32, i32
  }
  func.func @transform_2(%arg0: i32) -> (i32, i32) {
    %c0_i32 = arith.constant 0 : i32
    %c0_i32_0 = arith.constant 0 : i32
    %c0_i32_1 = arith.constant 0 : i32
    return %c0_i32, %c0_i32_0 : i32, i32
  }
  func.func @transform_3(%arg0: i32) -> (i32, i32) {
    %c0_i32 = arith.constant 0 : i32
    %c0_i32_0 = arith.constant 0 : i32
    %c0_i32_1 = arith.constant 0 : i32
    return %c0_i32, %c0_i32_0 : i32, i32
  }
  func.func @transform_4(%arg0: i32) -> (i32, i32) {
    %c0_i32 = arith.constant 0 : i32
    %c0_i32_0 = arith.constant 0 : i32
    %c0_i32_1 = arith.constant 0 : i32
    return %c0_i32, %c0_i32_0 : i32, i32
  }
  func.func @transform_5(%arg0: i32) -> (i32, i32) {
    %c0_i32 = arith.constant 0 : i32
    %c0_i32_0 = arith.constant 0 : i32
    %c0_i32_1 = arith.constant 0 : i32
    return %c0_i32, %c0_i32_0 : i32, i32
  }
  func.func @transform_6(%arg0: i32) -> (i32, i32) {
    %c0_i32 = arith.constant 0 : i32
    %c0_i32_0 = arith.constant 0 : i32
    %c0_i32_1 = arith.constant 0 : i32
    return %c0_i32, %c0_i32_0 : i32, i32
  }
  func.func @transform_7(%arg0: i32) -> (i32, i32) {
    %c0_i32 = arith.constant 0 : i32
    %c0_i32_0 = arith.constant 0 : i32
    return %arg0, %c0_i32 : i32, i32
  }
}

</mosaic_0001>

<llo_original>
// kernel: tpu_custom_call.1
$region0: #{tpu_custom_call.1}
  #allocation0 [shape = 'u32[]', space=smem, size = 0x4, offset = 0x4, fixed_abs, tag = 'smem constant byte address 0x4 - core index']
  #allocation1 [shape = 'u32[144,128]{1,0:T(1,128)}', space=vmem, size = 0x12000, scoped, tag = 'internal scratch']
  %s0 = inlined_call_operand.vmem [shape: f32[8,32], index: 0, kind: input, shape index: {}]
  %s1 = inlined_call_operand.vmem [shape: bf16[32,256], index: 1, kind: input, shape index: {}]
  %s2 = inlined_call_operand.vmem [shape: f32[1,256], index: 2, kind: input, shape index: {}]
  %s3 = inlined_call_operand.hbm [shape: bf16[256,128], index: 3, kind: input, shape index: {}]
  %s4 = inlined_call_operand.vmem [shape: f32[1,128], index: 4, kind: input, shape index: {}]
  %s5 = inlined_call_operand.vmem [shape: bf16[128,16], index: 5, kind: input, shape index: {}]
  %s6 = inlined_call_operand.vmem [shape: f32[1,16], index: 6, kind: input, shape index: {}]
  %s7 = inlined_call_operand.hbm [shape: f32[8,16], index: 7, kind: output, shape index: {}]
  %s8 = sld [smem:[#allocation0]]
  $region42: #{tpu_custom_call.1} parent=0
    _
  %s10 = ssub.s32 1, %s8
  %s11 = scalar_select 0, %s10, %s8
  $region1: #{tpu_custom_call.1} parent=0
    #allocation2 [shape = 'u8[65536]{0}', space=vmem, size = 0x10000, scoped, tag = 'input window, operand 3, single buffered']
    #allocation3 [shape = 's32[1]{0}', space=sflag, size = 0x4, scoped, tag = 'scoped memory for tpu_custom_call.1']
    #allocation4 [shape = 's32[1]{0}', space=sflag, size = 0x4, scoped, tag = 'scoped memory for tpu_custom_call.1']
    #allocation5 [shape = 'u8[4096]{0}', space=vmem, size = 0x1000, scoped, tag = 'output window, operand 0, single buffered']
    %12 = vsyncpa [#allocation3], 0
    %13 = vsyncpa [#allocation4], 0
    // Predicated region
    $region2: #{tpu_custom_call.1} parent=1 // pred_check
      _
    $region3: #{tpu_custom_call.1} parent=1 // pred_check_branch
      %15 = sbr.rel (0) target = $region5
    $region4: #{tpu_custom_call.1} parent=1 // pred_region
      _
    $region5: #{tpu_custom_call.1} parent=1 // pred_fallthru
      _
    // Predicated region
    $region6: #{tpu_custom_call.1} parent=1 // pred_check
      _
    $region7: #{tpu_custom_call.1} parent=1 // pred_check_branch
      %17 = sbr.rel (0) target = $region9
    $region8: #{tpu_custom_call.1} parent=1 // pred_region
      _
    $region9: #{tpu_custom_call.1} parent=1 // pred_fallthru
      _
    // Predicated region
    $region10: #{tpu_custom_call.1} parent=1 // pred_check
      _
    $region11: #{tpu_custom_call.1} parent=1 // pred_check_branch
      %19 = sbr.rel (0) target = $region13
    $region12: #{tpu_custom_call.1} parent=1 // pred_region
      _
    $region13: #{tpu_custom_call.1} parent=1 // pred_fallthru
      _
    // Predicated region
    $region14: #{tpu_custom_call.1} parent=1 // pred_check
      _
    $region15: #{tpu_custom_call.1} parent=1 // pred_check_branch
      %21 = sbr.rel (0) target = $region17
    $region16: #{tpu_custom_call.1} parent=1 // pred_region
      %s23 = ssub.s32 2048, 2048
      %24 = vsyncadd [#allocation3], %s23
      %s25 = sshll.u32 [#allocation2], 4
      %s26 = int_to_ptr.vmem [resolvable:$true] %s25
      %31 = dma.hbm_to_vmem [thread:$0]  %s3, 2048, %s26, [#allocation3], 64, 64, 4
    $region17: #{tpu_custom_call.1} parent=1 // pred_fallthru
      _
    // Predicated region
    $region18: #{tpu_custom_call.1} parent=1 // pred_check
      _
    $region19: #{tpu_custom_call.1} parent=1 // pred_check_branch
      %33 = sbr.rel (0) target = $region21
    $region20: #{tpu_custom_call.1} parent=1 // pred_region
      _
    $region21: #{tpu_custom_call.1} parent=1 // pred_fallthru
      _
    // Predicated region
    $region22: #{tpu_custom_call.1} parent=1 // pred_check
      _
    $region23: #{tpu_custom_call.1} parent=1 // pred_check_branch
      %35 = sbr.rel (0) target = $region25
    $region24: #{tpu_custom_call.1} parent=1 // pred_region
      _
    $region25: #{tpu_custom_call.1} parent=1 // pred_fallthru
      _
    // Predicated region
    $region26: #{tpu_custom_call.1} parent=1 // pred_check
      _
    $region27: #{tpu_custom_call.1} parent=1 // pred_check_branch
      %37 = sbr.rel (0) target = $region29
    $region28: #{tpu_custom_call.1} parent=1 // pred_region
      _
    $region29: #{tpu_custom_call.1} parent=1 // pred_fallthru
      _
    // Predicated region
    $region30: #{tpu_custom_call.1} parent=1 // pred_check
      _
    $region31: #{tpu_custom_call.1} parent=1 // pred_check_branch
      %39 = sbr.rel (0) target = $region33
    $region32: #{tpu_custom_call.1} parent=1 // pred_region
      %40 = dma.done [#allocation3], 2048
    $region33: #{tpu_custom_call.1} parent=1 // pred_fallthru
      _
    %v42 = vld [vmem:[%s0] sm:$0xff]
    %v43 = vpack.c.bf16 %v42, %v42
    %v44 = vld [vmem:[%s1] sm:$0xff]
    %v45 = vld [vmem:[%s1 + $0x8] sm:$0xff]
    %v46 = vld [vmem:[%s1 + $0x10] sm:$0xff]
    %v47 = vld [vmem:[%s1 + $0x18] sm:$0xff]
    %v48 = vld [vmem:[%s2] sm:$0x3]
    %v50 = vlaneseq
    %v51 = vshrl.u32 %v50, 7
    %v52 = vsub.s32 0, %v51
    %v53 = vrot.slane %v48, %v52
    %v54 = vlaneseq
    %v55 = vshrl.u32 %v54, 7
    %v56 = vsub.s32 1, %v55
    %v57 = vrot.slane %v48, %v56
    %v64 = vunpack.c.l.b16 %v44
    %v65 = vunpack.c.h.b16 %v44
    %v66 = vunpack.c.l.b16 %v45
    %v67 = vunpack.c.h.b16 %v45
    %v68 = vunpack.c.l.b16 %v46
    %v69 = vunpack.c.h.b16 %v46
    %v70 = vunpack.c.l.b16 %v47
    %v71 = vunpack.c.h.b16 %v47
    %v72 = vpack.c.b16 %v66, %v64
    %v73 = vpack.c.b16 %v67, %v65
    %v74 = vpack.c.b16 %v70, %v68
    %v75 = vpack.c.b16 %v71, %v69
    %vm80 = vcmask 261120
    %v82 = vsel %vm80, %v43, 0
    %84 = vmatprep.subr.bf16.mxu0 %v73
    %85 = vmatpush1.bf16.msra.mxu0 %v72
    %86 = vmatprep.subr.bf16.mxu0 %v75
    %87 = vmatpush1.bf16.msra.mxu0 %v74
    %88 = vmatprep.subr.bf16.mxu0 0
    %89 = vmatpush1.bf16.msra.mxu0 0
    %90 = vmatprep.subr.bf16.mxu0 0
    %91 = vmatpush1.bf16.msra.mxu0 0
    %92 = vmatprep.subr.bf16.mxu0 0
    %93 = vmatpush1.bf16.msra.mxu0 0
    %94 = vmatprep.subr.bf16.mxu0 0
    %95 = vmatpush1.bf16.msra.mxu0 0
    %96 = vmatprep.subr.bf16.mxu0 0
    %97 = vmatpush1.bf16.msra.mxu0 0
    %98 = vmatprep.subr.bf16.mxu0 0
    %99 = vmatpush1.bf16.msra.mxu0 0
    %100 = vmatprep.subr.bf16.mxu0 0
    %101 = vmatpush1.bf16.msra.mxu0 0
    %102 = vmatprep.subr.bf16.mxu0 0
    %103 = vmatpush1.bf16.msra.mxu0 0
    %104 = vmatprep.subr.bf16.mxu0 0
    %105 = vmatpush1.bf16.msra.mxu0 0
    %106 = vmatprep.subr.bf16.mxu0 0
    %107 = vmatpush1.bf16.msra.mxu0 0
    %108 = vmatprep.subr.bf16.mxu0 0
    %109 = vmatpush1.bf16.msra.mxu0 0
    %110 = vmatprep.subr.bf16.mxu0 0
    %111 = vmatpush1.bf16.msra.mxu0 0
    %112 = vmatprep.subr.bf16.mxu0 0
    %113 = vmatpush1.bf16.msra.mxu0 0
    %114 = vmatprep.subr.bf16.mxu0 0
    %115 = vmatpush1.bf16.msra.mxu0 0
    %116 = vmatprep.mubr.bf16.mxu0 0
    %117 = vmatmul.mubr.bf16.gmra.mrb[0].mxu0 %v82
    %v118 = vpop.f32.mrb[0].mxu0
    %v119 = vadd.f32 %v53, %v118
    %v120 = vpop.f32.mrb[0].mxu0
    %v121 = vadd.f32 %v57, %v120
    %v122 = vpop.f32.mrb[0].mxu0
    %v123 = vpop.f32.mrb[0].mxu0
    %124 = vdwg.mxu0
    %v125 = vmax.f32 %v119, 0.0
    %v126 = vmax.f32 %v121, 0.0
    %v127 = vpack.c.bf16 %v125, %v125
    %v128 = vpack.c.bf16 %v126, %v126
    %v129 = vld [vmem:[#allocation2] sm:$0xf]
    %v130 = vld [vmem:[#allocation2 + $0x4] sm:$0xf]
    %v131 = vld [vmem:[#allocation2 + $0x8] sm:$0xf]
    %v132 = vld [vmem:[#allocation2 + $0xc] sm:$0xf]
    %v133 = vld [vmem:[#allocation2 + $0x10] sm:$0xf]
    %v134 = vld [vmem:[#allocation2 + $0x14] sm:$0xf]
    %v135 = vld [vmem:[#allocation2 + $0x18] sm:$0xf]
    %v136 = vld [vmem:[#allocation2 + $0x1c] sm:$0xf]
    %v137 = vld [vmem:[#allocation2 + $0x20] sm:$0xf]
    %v138 = vld [vmem:[#allocation2 + $0x24] sm:$0xf]
    %v139 = vld [vmem:[#allocation2 + $0x28] sm:$0xf]
    %v140 = vld [vmem:[#allocation2 + $0x2c] sm:$0xf]
    %v141 = vld [vmem:[#allocation2 + $0x30] sm:$0xf]
    %v142 = vld [vmem:[#allocation2 + $0x34] sm:$0xf]
    %v143 = vld [vmem:[#allocation2 + $0x38] sm:$0xf]
    %v144 = vld [vmem:[#allocation2 + $0x3c] sm:$0xf]
    %v145 = vld [vmem:[#allocation2 + $0x40] sm:$0xf]
    %v146 = vld [vmem:[#allocation2 + $0x44] sm:$0xf]
    %v147 = vld [vmem:[#allocation2 + $0x48] sm:$0xf]
    %v148 = vld [vmem:[#allocation2 + $0x4c] sm:$0xf]
    %v149 = vld [vmem:[#allocation2 + $0x50] sm:$0xf]
    %v150 = vld [vmem:[#allocation2 + $0x54] sm:$0xf]
    %v151 = vld [vmem:[#allocation2 + $0x58] sm:$0xf]
    %v152 = vld [vmem:[#allocation2 + $0x5c] sm:$0xf]
    %v153 = vld [vmem:[#allocation2 + $0x60] sm:$0xf]
    %v154 = vld [vmem:[#allocation2 + $0x64] sm:$0xf]
    %v155 = vld [vmem:[#allocation2 + $0x68] sm:$0xf]
    %v156 = vld [vmem:[#allocation2 + $0x6c] sm:$0xf]
    %v157 = vld [vmem:[#allocation2 + $0x70] sm:$0xf]
    %v158 = vld [vmem:[#allocation2 + $0x74] sm:$0xf]
    %v159 = vld [vmem:[#allocation2 + $0x78] sm:$0xf]
    %v160 = vld [vmem:[#allocation2 + $0x7c] sm:$0xf]
    %v161 = vld [vmem:[%s4] sm:$0x1]
    %v163 = vlaneseq
    %v164 = vshrl.u32 %v163, 7
    %v165 = vsub.s32 0, %v164
    %v166 = vrot.slane %v161, %v165
    %v200 = vunpack.c.l.b16 %v129
    %v201 = vunpack.c.l.b16 %v130
    %v202 = vunpack.c.l.b16 %v131
    %v203 = vunpack.c.l.b16 %v132
    %v204 = vunpack.c.l.b16 %v133
    %v205 = vunpack.c.l.b16 %v134
    %v206 = vunpack.c.l.b16 %v135
    %v207 = vunpack.c.l.b16 %v136
    %v208 = vunpack.c.l.b16 %v137
    %v209 = vunpack.c.l.b16 %v138
    %v210 = vunpack.c.l.b16 %v139
    %v211 = vunpack.c.l.b16 %v140
    %v212 = vunpack.c.l.b16 %v141
    %v213 = vunpack.c.l.b16 %v142
    %v214 = vunpack.c.l.b16 %v143
    %v215 = vunpack.c.l.b16 %v144
    %v216 = vunpack.c.l.b16 %v145
    %v217 = vunpack.c.l.b16 %v146
    %v218 = vunpack.c.l.b16 %v147
    %v219 = vunpack.c.l.b16 %v148
    %v220 = vunpack.c.l.b16 %v149
    %v221 = vunpack.c.l.b16 %v150
    %v222 = vunpack.c.l.b16 %v151
    %v223 = vunpack.c.l.b16 %v152
    %v224 = vunpack.c.l.b16 %v153
    %v225 = vunpack.c.l.b16 %v154
    %v226 = vunpack.c.l.b16 %v155
    %v227 = vunpack.c.l.b16 %v156
    %v228 = vunpack.c.l.b16 %v157
    %v229 = vunpack.c.l.b16 %v158
    %v230 = vunpack.c.l.b16 %v159
    %v231 = vunpack.c.l.b16 %v160
    %v232 = vpack.c.b16 %v201, %v200
    %v233 = vpack.c.b16 %v203, %v202
    %v234 = vpack.c.b16 %v205, %v204
    %v235 = vpack.c.b16 %v207, %v206
    %v236 = vpack.c.b16 %v209, %v208
    %v237 = vpack.c.b16 %v211, %v210
    %v238 = vpack.c.b16 %v213, %v212
    %v239 = vpack.c.b16 %v215, %v214
    %v240 = vpack.c.b16 %v217, %v216
    %v241 = vpack.c.b16 %v219, %v218
    %v242 = vpack.c.b16 %v221, %v220
    %v243 = vpack.c.b16 %v223, %v222
    %v244 = vpack.c.b16 %v225, %v224
    %v245 = vpack.c.b16 %v227, %v226
    %v246 = vpack.c.b16 %v229, %v228
    %v247 = vpack.c.b16 %v231, %v230
    %264 = vmatprep.subr.bf16.mxu0 0
    %265 = vmatpush1.bf16.msra.mxu0 %v232
    %266 = vmatprep.subr.bf16.mxu0 0
    %267 = vmatpush1.bf16.msra.mxu0 %v233
    %268 = vmatprep.subr.bf16.mxu0 0
    %269 = vmatpush1.bf16.msra.mxu0 %v234
    %270 = vmatprep.subr.bf16.mxu0 0
    %271 = vmatpush1.bf16.msra.mxu0 %v235
    %272 = vmatprep.subr.bf16.mxu0 0
    %273 = vmatpush1.bf16.msra.mxu0 %v236
    %274 = vmatprep.subr.bf16.mxu0 0
    %275 = vmatpush1.bf16.msra.mxu0 %v237
    %276 = vmatprep.subr.bf16.mxu0 0
    %277 = vmatpush1.bf16.msra.mxu0 %v238
    %278 = vmatprep.subr.bf16.mxu0 0
    %279 = vmatpush1.bf16.msra.mxu0 %v239
    %280 = vmatprep.subr.bf16.mxu0 0
    %281 = vmatpush1.bf16.msra.mxu0 %v240
    %282 = vmatprep.subr.bf16.mxu0 0
    %283 = vmatpush1.bf16.msra.mxu0 %v241
    %284 = vmatprep.subr.bf16.mxu0 0
    %285 = vmatpush1.bf16.msra.mxu0 %v242
    %286 = vmatprep.subr.bf16.mxu0 0
    %287 = vmatpush1.bf16.msra.mxu0 %v243
    %288 = vmatprep.subr.bf16.mxu0 0
    %289 = vmatpush1.bf16.msra.mxu0 %v244
    %290 = vmatprep.subr.bf16.mxu0 0
    %291 = vmatpush1.bf16.msra.mxu0 %v245
    %292 = vmatprep.subr.bf16.mxu0 0
    %293 = vmatpush1.bf16.msra.mxu0 %v246
    %294 = vmatprep.subr.bf16.mxu0 0
    %295 = vmatpush1.bf16.msra.mxu0 %v247
    %296 = vmatprep.mubr.bf16.mxu0 %v128
    %297 = vmatmul.mubr.bf16.gmra.mrb[0].mxu0 %v127
    %v298 = vpop.f32.mrb[0].mxu0
    %v299 = vadd.f32 %v166, %v298
    %v300 = vpop.f32.mrb[0].mxu0
    %v301 = vpop.f32.mrb[0].mxu0
    %v302 = vpop.f32.mrb[0].mxu0
    %303 = vdwg.mxu0
    %v304 = vmax.f32 %v299, 0.0
    %v305 = vpack.c.bf16 %v304, %v304
    %v306 = vld [vmem:[%s5] sm:$0xf]
    %v307 = vld [vmem:[%s5 + $0x4] sm:$0xf]
    %v308 = vld [vmem:[%s5 + $0x8] sm:$0xf]
    %v309 = vld [vmem:[%s5 + $0xc] sm:$0xf]
    %v310 = vld [vmem:[%s5 + $0x10] sm:$0xf]
    %v311 = vld [vmem:[%s5 + $0x14] sm:$0xf]
    %v312 = vld [vmem:[%s5 + $0x18] sm:$0xf]
    %v313 = vld [vmem:[%s5 + $0x1c] sm:$0xf]
    %v314 = vld [vmem:[%s5 + $0x20] sm:$0xf]
    %v315 = vld [vmem:[%s5 + $0x24] sm:$0xf]
    %v316 = vld [vmem:[%s5 + $0x28] sm:$0xf]
    %v317 = vld [vmem:[%s5 + $0x2c] sm:$0xf]
    %v318 = vld [vmem:[%s5 + $0x30] sm:$0xf]
    %v319 = vld [vmem:[%s5 + $0x34] sm:$0xf]
    %v320 = vld [vmem:[%s5 + $0x38] sm:$0xf]
    %v321 = vld [vmem:[%s5 + $0x3c] sm:$0xf]
    %v322 = vld [vmem:[%s6] sm:$0x1]
    %v324 = vlaneseq
    %v325 = vshrl.u32 %v324, 7
    %v326 = vsub.s32 0, %v325
    %v327 = vrot.slane %v322, %v326
    %v345 = vunpack.c.l.b16 %v306
    %v346 = vunpack.c.l.b16 %v307
    %v347 = vunpack.c.l.b16 %v308
    %v348 = vunpack.c.l.b16 %v309
    %v349 = vunpack.c.l.b16 %v310
    %v350 = vunpack.c.l.b16 %v311
    %v351 = vunpack.c.l.b16 %v312
    %v352 = vunpack.c.l.b16 %v313
    %v353 = vunpack.c.l.b16 %v314
    %v354 = vunpack.c.l.b16 %v315
    %v355 = vunpack.c.l.b16 %v316
    %v356 = vunpack.c.l.b16 %v317
    %v357 = vunpack.c.l.b16 %v318
    %v358 = vunpack.c.l.b16 %v319
    %v359 = vunpack.c.l.b16 %v320
    %v360 = vunpack.c.l.b16 %v321
    %v361 = vpack.c.b16 %v346, %v345
    %v362 = vpack.c.b16 %v348, %v347
    %v363 = vpack.c.b16 %v350, %v349
    %v364 = vpack.c.b16 %v352, %v351
    %v365 = vpack.c.b16 %v354, %v353
    %v366 = vpack.c.b16 %v356, %v355
    %v367 = vpack.c.b16 %v358, %v357
    %v368 = vpack.c.b16 %v360, %v359
    %377 = vmatprep.subr.bf16.mxu0 0
    %378 = vmatpush1.bf16.msra.mxu0 %v361
    %379 = vmatprep.subr.bf16.mxu0 0
    %380 = vmatpush1.bf16.msra.mxu0 %v362
    %381 = vmatprep.subr.bf16.mxu0 0
    %382 = vmatpush1.bf16.msra.mxu0 %v363
    %383 = vmatprep.subr.bf16.mxu0 0
    %384 = vmatpush1.bf16.msra.mxu0 %v364
    %385 = vmatprep.subr.bf16.mxu0 0
    %386 = vmatpush1.bf16.msra.mxu0 %v365
    %387 = vmatprep.subr.bf16.mxu0 0
    %388 = vmatpush1.bf16.msra.mxu0 %v366
    %389 = vmatprep.subr.bf16.mxu0 0
    %390 = vmatpush1.bf16.msra.mxu0 %v367
    %391 = vmatprep.subr.bf16.mxu0 0
    %392 = vmatpush1.bf16.msra.mxu0 %v368
    %393 = vmatprep.subr.bf16.mxu0 0
    %394 = vmatpush1.bf16.msra.mxu0 0
    %395 = vmatprep.subr.bf16.mxu0 0
    %396 = vmatpush1.bf16.msra.mxu0 0
    %397 = vmatprep.subr.bf16.mxu0 0
    %398 = vmatpush1.bf16.msra.mxu0 0
    %399 = vmatprep.subr.bf16.mxu0 0
    %400 = vmatpush1.bf16.msra.mxu0 0
    %401 = vmatprep.subr.bf16.mxu0 0
    %402 = vmatpush1.bf16.msra.mxu0 0
    %403 = vmatprep.subr.bf16.mxu0 0
    %404 = vmatpush1.bf16.msra.mxu0 0
    %405 = vmatprep.subr.bf16.mxu0 0
    %406 = vmatpush1.bf16.msra.mxu0 0
    %407 = vmatprep.subr.bf16.mxu0 0
    %408 = vmatpush1.bf16.msra.mxu0 0
    %409 = vmatprep.mubr.bf16.mxu0 0
    %410 = vmatmul.mubr.bf16.gmra.mrb[0].mxu0 %v305
    %v411 = vpop.f32.mrb[0].mxu0
    %v412 = vadd.f32 %v327, %v411
    %v413 = vpop.f32.mrb[0].mxu0
    %v414 = vpop.f32.mrb[0].mxu0
    %v415 = vpop.f32.mrb[0].mxu0
    %416 = vdwg.mxu0
    %v417 = vxor.u32 %v412, 2147483648
    %v418 = vmul.f32 %v417, 1.442695
    %v419 = vpow.pop %v418
    %v420 = vadd.f32 %v419, 1.0
    %v421 = vrcp.pop %v420
    %v422 = vmul.f32 1.0, %v421
    %vm423 = vcmask 130048
    %424 = vst.msk [vmem:[#allocation5] sm:$0xff] %vm423, %v422
    // Predicated region
    $region34: #{tpu_custom_call.1} parent=1 // pred_check
      _
    $region35: #{tpu_custom_call.1} parent=1 // pred_check_branch
      %426 = sbr.rel (0) target = $region37
    $region36: #{tpu_custom_call.1} parent=1 // pred_region
      %s428 = ssub.s32 128, 128
      %429 = vsyncadd [#allocation4], %s428
      %s431 = sshll.u32 [#allocation5], 4
      %s432 = int_to_ptr.vmem [resolvable:$true] %s431
      %434 = dma.vmem_to_hbm [thread:$0]  %s432, 128, %s7, [#allocation4]
    $region37: #{tpu_custom_call.1} parent=1 // pred_fallthru
      _
    // Predicated region
    $region38: #{tpu_custom_call.1} parent=1 // pred_check
      _
    $region39: #{tpu_custom_call.1} parent=1 // pred_check_branch
      %436 = sbr.rel (0) target = $region41
    $region40: #{tpu_custom_call.1} parent=1 // pred_region
      %437 = dma.done [#allocation4], 128
    $region41: #{tpu_custom_call.1} parent=1 // pred_fallthru
      _
    %438 = vsyncpa [#allocation3], 1
    %439 = vsyncpa [#allocation4], 1

</llo_original>
